<compile_context>
chip_gen: v5e
topology: v5e:2x2
jax: 0.10.0
libtpu: 0.0.40
codegen_flags: <defaults>
</compile_context>

<pallas_src>
import numpy as np
import jax
import jax.numpy as jnp
from jax import lax
from jax.experimental import pallas as pl
from jax.experimental.pallas import tpu as pltpu

INPUT_SIZE = 4
HIDDEN_SIZE = 4
LANE_CHUNK = 512      # target lanes per grid step (multiple of 128)


def _disc_kernel(x_ref, wih_ref, whh_ref, b_ref, wl_ref, out_ref):
    # Shapes for one lane chunk (CH lanes = sequences; features/hidden on sublanes):
    #   x_ref   : (L, 4, CH)   time-major input
    #   wih_ref : (4, 4, CH)   [d, a, nl] = W_ih[node(nl), a, d]   (lane panels)
    #   whh_ref : (4, 4, CH)   [b, a, nl] = W_hh[node(nl), a, b]   (lane panels)
    #   b_ref   : (4, CH)      (b_ih + b_hh)[node(nl), a]
    #   wl_ref  : (4, CH)      shared Linear weight broadcast along lanes
    #   out_ref : (1, 1, CH)   per-lane partial of sum_t w_L . h_t
    L, _, CH = x_ref.shape

    # Hoist the per-chunk weight panels out of the serial time loop
    # (each is a (4, CH) lane-dense panel -> a few vregs, reused every step).
    wih = [wih_ref[d] for d in range(INPUT_SIZE)]
    whh = [whh_ref[b] for b in range(HIDDEN_SIZE)]
    bias = b_ref[...]

    def step(t, carry):
        h, hsum = carry                              # (4, CH) each
        xt = x_ref[t]                                # per-step (4, CH) load
        # Input projection fused into the recurrence; these 4 FMAs depend only
        # on x[t] so they sit off the h->h critical path.
        pre = bias
        for d in range(INPUT_SIZE):
            pre = pre + wih[d] * xt[d:d + 1, :]
        for b in range(HIDDEN_SIZE):
            pre = pre + whh[b] * h[b:b + 1, :]
        h_new = jnp.maximum(pre, 0.0)                # relu nonlinearity
        return h_new, hsum + h_new

    zeros = jnp.zeros((HIDDEN_SIZE, CH), jnp.float32)
    _, hsum = lax.fori_loop(0, L, step, (zeros, zeros), unroll=min(L, 8))

    # Lane-dense partial: sum_t w_L . h_t per sequence (Linear bias added in wrapper).
    out_ref[...] = jnp.sum(hsum * wl_ref[...], axis=0).reshape(1, 1, CH)


def discriminator_forward(x, params):
    """x: (batch, 2*node_num, L, 4) float32. Returns the scalar `result`."""
    w_ih, w_hh, b_ih, b_hh, w_l, b_l = params
    batch, two_n, L, D = x.shape
    node_num = two_n // 2
    S = 2 * batch
    NL = node_num * S

    # ---- layout glue: lanes = sequences (node-major blocks of size S), sublanes = feature ----
    xr = x.reshape(batch, node_num, 2, L, D)             # (k, n, p, t, d)
    xr = jnp.transpose(xr, (3, 4, 1, 0, 2))              # (t, d, n, k, p)
    x_l = xr.reshape(L, D, NL)                           # nl = n*S + (2k+p)

    # Per-node weights expanded so lane block [n*S, (n+1)*S) carries node n's weights.
    wih_p = jnp.repeat(jnp.transpose(w_ih, (2, 1, 0)), S, axis=2)   # (d, a, NL)
    whh_p = jnp.repeat(jnp.transpose(w_hh, (2, 1, 0)), S, axis=2)   # (b, a, NL)
    b_p = jnp.repeat(jnp.transpose(b_ih + b_hh), S, axis=1)         # (a, NL)
    wl_p = jnp.broadcast_to(w_l.reshape(HIDDEN_SIZE, 1), (HIDDEN_SIZE, NL))

    # ---- lane chunking: pad NL to a 128-aligned chunk multiple.  Padded lanes have
    # all-zero weights AND inputs, so h/hsum/partials stay exactly 0 there. ----
    if NL <= LANE_CHUNK:
        chunk = max(128, ((NL + 127) // 128) * 128)
    else:
        chunk = LANE_CHUNK
    NL_pad = ((NL + chunk - 1) // chunk) * chunk
    grid = NL_pad // chunk
    pad = NL_pad - NL
    if pad:
        x_l = jnp.pad(x_l, ((0, 0), (0, 0), (0, pad)))
        wih_p = jnp.pad(wih_p, ((0, 0), (0, 0), (0, pad)))
        whh_p = jnp.pad(whh_p, ((0, 0), (0, 0), (0, pad)))
        b_p = jnp.pad(b_p, ((0, 0), (0, pad)))
        wl_p = jnp.pad(wl_p, ((0, 0), (0, pad)))

    # VMEM budget: per-chunk blocks, double buffered, plus headroom; capped to stay
    # inside v7x's 64 MiB physical VMEM while raising the v5e/v6e scoped defaults.
    per_block = 4 * (L * D * chunk
                     + 2 * HIDDEN_SIZE * HIDDEN_SIZE * chunk
                     + 2 * HIDDEN_SIZE * chunk
                     + chunk)
    vmem_limit = int(min(max(2 * per_block + (4 << 20), 16 << 20), 48 << 20))

    partials = pl.pallas_call(
        _disc_kernel,
        grid=(grid,),
        out_shape=jax.ShapeDtypeStruct((grid, 1, chunk), jnp.float32),
        in_specs=[
            pl.BlockSpec((L, D, chunk), lambda i: (0, 0, i)),
            pl.BlockSpec((INPUT_SIZE, HIDDEN_SIZE, chunk), lambda i: (0, 0, i)),
            pl.BlockSpec((HIDDEN_SIZE, HIDDEN_SIZE, chunk), lambda i: (0, 0, i)),
            pl.BlockSpec((HIDDEN_SIZE, chunk), lambda i: (0, i)),
            pl.BlockSpec((HIDDEN_SIZE, chunk), lambda i: (0, i)),
        ],
        out_specs=pl.BlockSpec((1, 1, chunk), lambda i: (i, 0, 0)),
        compiler_params=pltpu.CompilerParams(
            dimension_semantics=("parallel",),
            vmem_limit_bytes=vmem_limit),
    )(x_l, wih_p, whh_p, b_p, wl_p)

    # Shared Linear bias contributes once per (real sequence, timestep).
    return jnp.sum(partials) + b_l[0] * jnp.float32(NL * L)


def reference(x, params):
    """Pure numpy re-implementation of the PyTorch forward pass."""
    w_ih, w_hh, b_ih, b_hh, w_l, b_l = [np.asarray(p, np.float32) for p in params]
    x = np.asarray(x, np.float32)
    batch, two_n, L, _ = x.shape
    node_num = two_n // 2
    total = np.float32(0.0)
    for k in range(batch):
        for i in range(node_num):
            for j in (2 * i, 2 * i + 1):
                seq = x[k, j]                            # (L, 4)
                h = np.zeros(HIDDEN_SIZE, np.float32)
                for t in range(L):
                    h = np.maximum(seq[t] @ w_ih[i].T + b_ih[i]
                                   + h @ w_hh[i].T + b_hh[i], 0.0)
                    total += h @ w_l[0] + b_l[0]         # Linear + sum
    return np.float32(total)


if __name__ == "__main__":
    batch, node_num, seq_len = 2, 2, 8

    key = jax.random.PRNGKey(0)
    keys = jax.random.split(key, 7)
    bound = 1.0 / np.sqrt(HIDDEN_SIZE)                   # PyTorch default init bound

    w_ih = jax.random.uniform(keys[0], (node_num, HIDDEN_SIZE, INPUT_SIZE),
                              jnp.float32, -bound, bound)
    w_hh = jax.random.uniform(keys[1], (node_num, HIDDEN_SIZE, HIDDEN_SIZE),
                              jnp.float32, -bound, bound)
    b_ih = jax.random.uniform(keys[2], (node_num, HIDDEN_SIZE),
                              jnp.float32, -bound, bound)
    b_hh = jax.random.uniform(keys[3], (node_num, HIDDEN_SIZE),
                              jnp.float32, -bound, bound)
    w_l = jax.random.uniform(keys[4], (1, HIDDEN_SIZE), jnp.float32, -bound, bound)
    b_l = jax.random.uniform(keys[5], (1,), jnp.float32, -bound, bound)

    x = jax.random.normal(keys[6], (batch, 2 * node_num, seq_len, INPUT_SIZE),
                          jnp.float32)

    params = (w_ih, w_hh, b_ih, b_hh, w_l, b_l)
    out = discriminator_forward(x, params)
    out = jax.block_until_ready(out)

    ref = reference(x, params)
    assert np.allclose(np.asarray(out), ref, rtol=1e-4, atol=1e-4), (float(out), float(ref))
    print("KERNEL_OK")
</pallas_src>

<mosaic_0001>
module attributes {stable_mosaic.version = 11 : i64} {
  func.func @_disc_kernel(%arg0: i32, %arg1: memref<8x4x128xf32, #tpu.memory_space<vmem>>, %arg2: memref<4x4x128xf32, #tpu.memory_space<vmem>>, %arg3: memref<4x4x128xf32, #tpu.memory_space<vmem>>, %arg4: memref<4x128xf32, #tpu.memory_space<vmem>>, %arg5: memref<4x128xf32, #tpu.memory_space<vmem>>, %arg6: memref<1x1x128xf32, #tpu.memory_space<vmem>>) attributes {dimension_semantics = [#tpu.dimension_semantics<parallel>], iteration_bounds = array<i64: 1>, scalar_prefetch = 0 : i64, scratch_operands = 0 : i64, tpu.core_type = #tpu.core_type<tc>, window_params = [{transform_indices = @transform_0, window_bounds = array<i64: 8, 4, 128>}, {transform_indices = @transform_1, window_bounds = array<i64: 4, 4, 128>}, {transform_indices = @transform_2, window_bounds = array<i64: 4, 4, 128>}, {transform_indices = @transform_3, window_bounds = array<i64: 4, 128>}, {transform_indices = @transform_4, window_bounds = array<i64: 4, 128>}, {transform_indices = @transform_5, window_bounds = array<i64: 1, 1, 128>}]} {
    %c0 = arith.constant 0 : index
    %c0_0 = arith.constant 0 : index
    %c0_1 = arith.constant 0 : index
    %0 = vector.load %arg2[%c0, %c0_0, %c0_1] : memref<4x4x128xf32, #tpu.memory_space<vmem>>, vector<1x4x128xf32>
    %1 = vector.shape_cast %0 : vector<1x4x128xf32> to vector<4x128xf32>
    %c1 = arith.constant 1 : index
    %c0_2 = arith.constant 0 : index
    %c0_3 = arith.constant 0 : index
    %2 = vector.load %arg2[%c1, %c0_2, %c0_3] : memref<4x4x128xf32, #tpu.memory_space<vmem>>, vector<1x4x128xf32>
    %3 = vector.shape_cast %2 : vector<1x4x128xf32> to vector<4x128xf32>
    %c2 = arith.constant 2 : index
    %c0_4 = arith.constant 0 : index
    %c0_5 = arith.constant 0 : index
    %4 = vector.load %arg2[%c2, %c0_4, %c0_5] : memref<4x4x128xf32, #tpu.memory_space<vmem>>, vector<1x4x128xf32>
    %5 = vector.shape_cast %4 : vector<1x4x128xf32> to vector<4x128xf32>
    %c3 = arith.constant 3 : index
    %c0_6 = arith.constant 0 : index
    %c0_7 = arith.constant 0 : index
    %6 = vector.load %arg2[%c3, %c0_6, %c0_7] : memref<4x4x128xf32, #tpu.memory_space<vmem>>, vector<1x4x128xf32>
    %7 = vector.shape_cast %6 : vector<1x4x128xf32> to vector<4x128xf32>
    %c0_8 = arith.constant 0 : index
    %c0_9 = arith.constant 0 : index
    %c0_10 = arith.constant 0 : index
    %8 = vector.load %arg3[%c0_8, %c0_9, %c0_10] : memref<4x4x128xf32, #tpu.memory_space<vmem>>, vector<1x4x128xf32>
    %9 = vector.shape_cast %8 : vector<1x4x128xf32> to vector<4x128xf32>
    %c1_11 = arith.constant 1 : index
    %c0_12 = arith.constant 0 : index
    %c0_13 = arith.constant 0 : index
    %10 = vector.load %arg3[%c1_11, %c0_12, %c0_13] : memref<4x4x128xf32, #tpu.memory_space<vmem>>, vector<1x4x128xf32>
    %11 = vector.shape_cast %10 : vector<1x4x128xf32> to vector<4x128xf32>
    %c2_14 = arith.constant 2 : index
    %c0_15 = arith.constant 0 : index
    %c0_16 = arith.constant 0 : index
    %12 = vector.load %arg3[%c2_14, %c0_15, %c0_16] : memref<4x4x128xf32, #tpu.memory_space<vmem>>, vector<1x4x128xf32>
    %13 = vector.shape_cast %12 : vector<1x4x128xf32> to vector<4x128xf32>
    %c3_17 = arith.constant 3 : index
    %c0_18 = arith.constant 0 : index
    %c0_19 = arith.constant 0 : index
    %14 = vector.load %arg3[%c3_17, %c0_18, %c0_19] : memref<4x4x128xf32, #tpu.memory_space<vmem>>, vector<1x4x128xf32>
    %15 = vector.shape_cast %14 : vector<1x4x128xf32> to vector<4x128xf32>
    %c0_20 = arith.constant 0 : index
    %c0_21 = arith.constant 0 : index
    %16 = vector.load %arg4[%c0_20, %c0_21] : memref<4x128xf32, #tpu.memory_space<vmem>>, vector<4x128xf32>
    %cst = arith.constant 0.000000e+00 : f32
    %17 = vector.broadcast %cst : f32 to vector<4x128xf32>
    %c0_i32 = arith.constant 0 : i32
    %18 = arith.index_cast %c0_i32 : i32 to index
    %c0_22 = arith.constant 0 : index
    %c0_23 = arith.constant 0 : index
    %19 = vector.load %arg1[%18, %c0_22, %c0_23] : memref<8x4x128xf32, #tpu.memory_space<vmem>>, vector<1x4x128xf32>
    %20 = vector.shape_cast %19 : vector<1x4x128xf32> to vector<4x128xf32>
    %21 = vector.extract_strided_slice %20 {offsets = [0, 0], sizes = [1, 128], strides = [1, 1]} : vector<4x128xf32> to vector<1x128xf32>
    %22 = vector.broadcast %21 : vector<1x128xf32> to vector<4x128xf32>
    %23 = arith.mulf %1, %22 : vector<4x128xf32>
    %24 = arith.addf %16, %23 : vector<4x128xf32>
    %25 = vector.extract_strided_slice %20 {offsets = [1, 0], sizes = [1, 128], strides = [1, 1]} : vector<4x128xf32> to vector<1x128xf32>
    %26 = vector.broadcast %25 : vector<1x128xf32> to vector<4x128xf32>
    %27 = arith.mulf %3, %26 : vector<4x128xf32>
    %28 = arith.addf %24, %27 : vector<4x128xf32>
    %29 = vector.extract_strided_slice %20 {offsets = [2, 0], sizes = [1, 128], strides = [1, 1]} : vector<4x128xf32> to vector<1x128xf32>
    %30 = vector.broadcast %29 : vector<1x128xf32> to vector<4x128xf32>
    %31 = arith.mulf %5, %30 : vector<4x128xf32>
    %32 = arith.addf %28, %31 : vector<4x128xf32>
    %33 = vector.extract_strided_slice %20 {offsets = [3, 0], sizes = [1, 128], strides = [1, 1]} : vector<4x128xf32> to vector<1x128xf32>
    %34 = vector.broadcast %33 : vector<1x128xf32> to vector<4x128xf32>
    %35 = arith.mulf %7, %34 : vector<4x128xf32>
    %36 = arith.addf %32, %35 : vector<4x128xf32>
    %37 = vector.extract_strided_slice %17 {offsets = [0, 0], sizes = [1, 128], strides = [1, 1]} : vector<4x128xf32> to vector<1x128xf32>
    %38 = vector.broadcast %37 : vector<1x128xf32> to vector<4x128xf32>
    %39 = arith.mulf %9, %38 : vector<4x128xf32>
    %40 = arith.addf %36, %39 : vector<4x128xf32>
    %41 = vector.extract_strided_slice %17 {offsets = [1, 0], sizes = [1, 128], strides = [1, 1]} : vector<4x128xf32> to vector<1x128xf32>
    %42 = vector.broadcast %41 : vector<1x128xf32> to vector<4x128xf32>
    %43 = arith.mulf %11, %42 : vector<4x128xf32>
    %44 = arith.addf %40, %43 : vector<4x128xf32>
    %45 = vector.extract_strided_slice %17 {offsets = [2, 0], sizes = [1, 128], strides = [1, 1]} : vector<4x128xf32> to vector<1x128xf32>
    %46 = vector.broadcast %45 : vector<1x128xf32> to vector<4x128xf32>
    %47 = arith.mulf %13, %46 : vector<4x128xf32>
    %48 = arith.addf %44, %47 : vector<4x128xf32>
    %49 = vector.extract_strided_slice %17 {offsets = [3, 0], sizes = [1, 128], strides = [1, 1]} : vector<4x128xf32> to vector<1x128xf32>
    %50 = vector.broadcast %49 : vector<1x128xf32> to vector<4x128xf32>
    %51 = arith.mulf %15, %50 : vector<4x128xf32>
    %52 = arith.addf %48, %51 : vector<4x128xf32>
    %cst_24 = arith.constant 0.000000e+00 : f32
    %53 = vector.broadcast %cst_24 : f32 to vector<4x128xf32>
    %54 = arith.maximumf %52, %53 : vector<4x128xf32>
    %55 = arith.addf %17, %54 : vector<4x128xf32>
    %c1_i32 = arith.constant 1 : i32
    %56 = arith.index_cast %c1_i32 : i32 to index
    %c0_25 = arith.constant 0 : index
    %c0_26 = arith.constant 0 : index
    %57 = vector.load %arg1[%56, %c0_25, %c0_26] : memref<8x4x128xf32, #tpu.memory_space<vmem>>, vector<1x4x128xf32>
    %58 = vector.shape_cast %57 : vector<1x4x128xf32> to vector<4x128xf32>
    %59 = vector.extract_strided_slice %58 {offsets = [0, 0], sizes = [1, 128], strides = [1, 1]} : vector<4x128xf32> to vector<1x128xf32>
    %60 = vector.broadcast %59 : vector<1x128xf32> to vector<4x128xf32>
    %61 = arith.mulf %1, %60 : vector<4x128xf32>
    %62 = arith.addf %16, %61 : vector<4x128xf32>
    %63 = vector.extract_strided_slice %58 {offsets = [1, 0], sizes = [1, 128], strides = [1, 1]} : vector<4x128xf32> to vector<1x128xf32>
    %64 = vector.broadcast %63 : vector<1x128xf32> to vector<4x128xf32>
    %65 = arith.mulf %3, %64 : vector<4x128xf32>
    %66 = arith.addf %62, %65 : vector<4x128xf32>
    %67 = vector.extract_strided_slice %58 {offsets = [2, 0], sizes = [1, 128], strides = [1, 1]} : vector<4x128xf32> to vector<1x128xf32>
    %68 = vector.broadcast %67 : vector<1x128xf32> to vector<4x128xf32>
    %69 = arith.mulf %5, %68 : vector<4x128xf32>
    %70 = arith.addf %66, %69 : vector<4x128xf32>
    %71 = vector.extract_strided_slice %58 {offsets = [3, 0], sizes = [1, 128], strides = [1, 1]} : vector<4x128xf32> to vector<1x128xf32>
    %72 = vector.broadcast %71 : vector<1x128xf32> to vector<4x128xf32>
    %73 = arith.mulf %7, %72 : vector<4x128xf32>
    %74 = arith.addf %70, %73 : vector<4x128xf32>
    %75 = vector.extract_strided_slice %54 {offsets = [0, 0], sizes = [1, 128], strides = [1, 1]} : vector<4x128xf32> to vector<1x128xf32>
    %76 = vector.broadcast %75 : vector<1x128xf32> to vector<4x128xf32>
    %77 = arith.mulf %9, %76 : vector<4x128xf32>
    %78 = arith.addf %74, %77 : vector<4x128xf32>
    %79 = vector.extract_strided_slice %54 {offsets = [1, 0], sizes = [1, 128], strides = [1, 1]} : vector<4x128xf32> to vector<1x128xf32>
    %80 = vector.broadcast %79 : vector<1x128xf32> to vector<4x128xf32>
    %81 = arith.mulf %11, %80 : vector<4x128xf32>
    %82 = arith.addf %78, %81 : vector<4x128xf32>
    %83 = vector.extract_strided_slice %54 {offsets = [2, 0], sizes = [1, 128], strides = [1, 1]} : vector<4x128xf32> to vector<1x128xf32>
    %84 = vector.broadcast %83 : vector<1x128xf32> to vector<4x128xf32>
    %85 = arith.mulf %13, %84 : vector<4x128xf32>
    %86 = arith.addf %82, %85 : vector<4x128xf32>
    %87 = vector.extract_strided_slice %54 {offsets = [3, 0], sizes = [1, 128], strides = [1, 1]} : vector<4x128xf32> to vector<1x128xf32>
    %88 = vector.broadcast %87 : vector<1x128xf32> to vector<4x128xf32>
    %89 = arith.mulf %15, %88 : vector<4x128xf32>
    %90 = arith.addf %86, %89 : vector<4x128xf32>
    %cst_27 = arith.constant 0.000000e+00 : f32
    %91 = vector.broadcast %cst_27 : f32 to vector<4x128xf32>
    %92 = arith.maximumf %90, %91 : vector<4x128xf32>
    %93 = arith.addf %55, %92 : vector<4x128xf32>
    %c2_i32 = arith.constant 2 : i32
    %94 = arith.index_cast %c2_i32 : i32 to index
    %c0_28 = arith.constant 0 : index
    %c0_29 = arith.constant 0 : index
    %95 = vector.load %arg1[%94, %c0_28, %c0_29] : memref<8x4x128xf32, #tpu.memory_space<vmem>>, vector<1x4x128xf32>
    %96 = vector.shape_cast %95 : vector<1x4x128xf32> to vector<4x128xf32>
    %97 = vector.extract_strided_slice %96 {offsets = [0, 0], sizes = [1, 128], strides = [1, 1]} : vector<4x128xf32> to vector<1x128xf32>
    %98 = vector.broadcast %97 : vector<1x128xf32> to vector<4x128xf32>
    %99 = arith.mulf %1, %98 : vector<4x128xf32>
    %100 = arith.addf %16, %99 : vector<4x128xf32>
    %101 = vector.extract_strided_slice %96 {offsets = [1, 0], sizes = [1, 128], strides = [1, 1]} : vector<4x128xf32> to vector<1x128xf32>
    %102 = vector.broadcast %101 : vector<1x128xf32> to vector<4x128xf32>
    %103 = arith.mulf %3, %102 : vector<4x128xf32>
    %104 = arith.addf %100, %103 : vector<4x128xf32>
    %105 = vector.extract_strided_slice %96 {offsets = [2, 0], sizes = [1, 128], strides = [1, 1]} : vector<4x128xf32> to vector<1x128xf32>
    %106 = vector.broadcast %105 : vector<1x128xf32> to vector<4x128xf32>
    %107 = arith.mulf %5, %106 : vector<4x128xf32>
    %108 = arith.addf %104, %107 : vector<4x128xf32>
    %109 = vector.extract_strided_slice %96 {offsets = [3, 0], sizes = [1, 128], strides = [1, 1]} : vector<4x128xf32> to vector<1x128xf32>
    %110 = vector.broadcast %109 : vector<1x128xf32> to vector<4x128xf32>
    %111 = arith.mulf %7, %110 : vector<4x128xf32>
    %112 = arith.addf %108, %111 : vector<4x128xf32>
    %113 = vector.extract_strided_slice %92 {offsets = [0, 0], sizes = [1, 128], strides = [1, 1]} : vector<4x128xf32> to vector<1x128xf32>
    %114 = vector.broadcast %113 : vector<1x128xf32> to vector<4x128xf32>
    %115 = arith.mulf %9, %114 : vector<4x128xf32>
    %116 = arith.addf %112, %115 : vector<4x128xf32>
    %117 = vector.extract_strided_slice %92 {offsets = [1, 0], sizes = [1, 128], strides = [1, 1]} : vector<4x128xf32> to vector<1x128xf32>
    %118 = vector.broadcast %117 : vector<1x128xf32> to vector<4x128xf32>
    %119 = arith.mulf %11, %118 : vector<4x128xf32>
    %120 = arith.addf %116, %119 : vector<4x128xf32>
    %121 = vector.extract_strided_slice %92 {offsets = [2, 0], sizes = [1, 128], strides = [1, 1]} : vector<4x128xf32> to vector<1x128xf32>
    %122 = vector.broadcast %121 : vector<1x128xf32> to vector<4x128xf32>
    %123 = arith.mulf %13, %122 : vector<4x128xf32>
    %124 = arith.addf %120, %123 : vector<4x128xf32>
    %125 = vector.extract_strided_slice %92 {offsets = [3, 0], sizes = [1, 128], strides = [1, 1]} : vector<4x128xf32> to vector<1x128xf32>
    %126 = vector.broadcast %125 : vector<1x128xf32> to vector<4x128xf32>
    %127 = arith.mulf %15, %126 : vector<4x128xf32>
    %128 = arith.addf %124, %127 : vector<4x128xf32>
    %cst_30 = arith.constant 0.000000e+00 : f32
    %129 = vector.broadcast %cst_30 : f32 to vector<4x128xf32>
    %130 = arith.maximumf %128, %129 : vector<4x128xf32>
    %131 = arith.addf %93, %130 : vector<4x128xf32>
    %c3_i32 = arith.constant 3 : i32
    %132 = arith.index_cast %c3_i32 : i32 to index
    %c0_31 = arith.constant 0 : index
    %c0_32 = arith.constant 0 : index
    %133 = vector.load %arg1[%132, %c0_31, %c0_32] : memref<8x4x128xf32, #tpu.memory_space<vmem>>, vector<1x4x128xf32>
    %134 = vector.shape_cast %133 : vector<1x4x128xf32> to vector<4x128xf32>
    %135 = vector.extract_strided_slice %134 {offsets = [0, 0], sizes = [1, 128], strides = [1, 1]} : vector<4x128xf32> to vector<1x128xf32>
    %136 = vector.broadcast %135 : vector<1x128xf32> to vector<4x128xf32>
    %137 = arith.mulf %1, %136 : vector<4x128xf32>
    %138 = arith.addf %16, %137 : vector<4x128xf32>
    %139 = vector.extract_strided_slice %134 {offsets = [1, 0], sizes = [1, 128], strides = [1, 1]} : vector<4x128xf32> to vector<1x128xf32>
    %140 = vector.broadcast %139 : vector<1x128xf32> to vector<4x128xf32>
    %141 = arith.mulf %3, %140 : vector<4x128xf32>
    %142 = arith.addf %138, %141 : vector<4x128xf32>
    %143 = vector.extract_strided_slice %134 {offsets = [2, 0], sizes = [1, 128], strides = [1, 1]} : vector<4x128xf32> to vector<1x128xf32>
    %144 = vector.broadcast %143 : vector<1x128xf32> to vector<4x128xf32>
    %145 = arith.mulf %5, %144 : vector<4x128xf32>
    %146 = arith.addf %142, %145 : vector<4x128xf32>
    %147 = vector.extract_strided_slice %134 {offsets = [3, 0], sizes = [1, 128], strides = [1, 1]} : vector<4x128xf32> to vector<1x128xf32>
    %148 = vector.broadcast %147 : vector<1x128xf32> to vector<4x128xf32>
    %149 = arith.mulf %7, %148 : vector<4x128xf32>
    %150 = arith.addf %146, %149 : vector<4x128xf32>
    %151 = vector.extract_strided_slice %130 {offsets = [0, 0], sizes = [1, 128], strides = [1, 1]} : vector<4x128xf32> to vector<1x128xf32>
    %152 = vector.broadcast %151 : vector<1x128xf32> to vector<4x128xf32>
    %153 = arith.mulf %9, %152 : vector<4x128xf32>
    %154 = arith.addf %150, %153 : vector<4x128xf32>
    %155 = vector.extract_strided_slice %130 {offsets = [1, 0], sizes = [1, 128], strides = [1, 1]} : vector<4x128xf32> to vector<1x128xf32>
    %156 = vector.broadcast %155 : vector<1x128xf32> to vector<4x128xf32>
    %157 = arith.mulf %11, %156 : vector<4x128xf32>
    %158 = arith.addf %154, %157 : vector<4x128xf32>
    %159 = vector.extract_strided_slice %130 {offsets = [2, 0], sizes = [1, 128], strides = [1, 1]} : vector<4x128xf32> to vector<1x128xf32>
    %160 = vector.broadcast %159 : vector<1x128xf32> to vector<4x128xf32>
    %161 = arith.mulf %13, %160 : vector<4x128xf32>
    %162 = arith.addf %158, %161 : vector<4x128xf32>
    %163 = vector.extract_strided_slice %130 {offsets = [3, 0], sizes = [1, 128], strides = [1, 1]} : vector<4x128xf32> to vector<1x128xf32>
    %164 = vector.broadcast %163 : vector<1x128xf32> to vector<4x128xf32>
    %165 = arith.mulf %15, %164 : vector<4x128xf32>
    %166 = arith.addf %162, %165 : vector<4x128xf32>
    %cst_33 = arith.constant 0.000000e+00 : f32
    %167 = vector.broadcast %cst_33 : f32 to vector<4x128xf32>
    %168 = arith.maximumf %166, %167 : vector<4x128xf32>
    %169 = arith.addf %131, %168 : vector<4x128xf32>
    %c4_i32 = arith.constant 4 : i32
    %170 = arith.index_cast %c4_i32 : i32 to index
    %c0_34 = arith.constant 0 : index
    %c0_35 = arith.constant 0 : index
    %171 = vector.load %arg1[%170, %c0_34, %c0_35] : memref<8x4x128xf32, #tpu.memory_space<vmem>>, vector<1x4x128xf32>
    %172 = vector.shape_cast %171 : vector<1x4x128xf32> to vector<4x128xf32>
    %173 = vector.extract_strided_slice %172 {offsets = [0, 0], sizes = [1, 128], strides = [1, 1]} : vector<4x128xf32> to vector<1x128xf32>
    %174 = vector.broadcast %173 : vector<1x128xf32> to vector<4x128xf32>
    %175 = arith.mulf %1, %174 : vector<4x128xf32>
    %176 = arith.addf %16, %175 : vector<4x128xf32>
    %177 = vector.extract_strided_slice %172 {offsets = [1, 0], sizes = [1, 128], strides = [1, 1]} : vector<4x128xf32> to vector<1x128xf32>
    %178 = vector.broadcast %177 : vector<1x128xf32> to vector<4x128xf32>
    %179 = arith.mulf %3, %178 : vector<4x128xf32>
    %180 = arith.addf %176, %179 : vector<4x128xf32>
    %181 = vector.extract_strided_slice %172 {offsets = [2, 0], sizes = [1, 128], strides = [1, 1]} : vector<4x128xf32> to vector<1x128xf32>
    %182 = vector.broadcast %181 : vector<1x128xf32> to vector<4x128xf32>
    %183 = arith.mulf %5, %182 : vector<4x128xf32>
    %184 = arith.addf %180, %183 : vector<4x128xf32>
    %185 = vector.extract_strided_slice %172 {offsets = [3, 0], sizes = [1, 128], strides = [1, 1]} : vector<4x128xf32> to vector<1x128xf32>
    %186 = vector.broadcast %185 : vector<1x128xf32> to vector<4x128xf32>
    %187 = arith.mulf %7, %186 : vector<4x128xf32>
    %188 = arith.addf %184, %187 : vector<4x128xf32>
    %189 = vector.extract_strided_slice %168 {offsets = [0, 0], sizes = [1, 128], strides = [1, 1]} : vector<4x128xf32> to vector<1x128xf32>
    %190 = vector.broadcast %189 : vector<1x128xf32> to vector<4x128xf32>
    %191 = arith.mulf %9, %190 : vector<4x128xf32>
    %192 = arith.addf %188, %191 : vector<4x128xf32>
    %193 = vector.extract_strided_slice %168 {offsets = [1, 0], sizes = [1, 128], strides = [1, 1]} : vector<4x128xf32> to vector<1x128xf32>
    %194 = vector.broadcast %193 : vector<1x128xf32> to vector<4x128xf32>
    %195 = arith.mulf %11, %194 : vector<4x128xf32>
    %196 = arith.addf %192, %195 : vector<4x128xf32>
    %197 = vector.extract_strided_slice %168 {offsets = [2, 0], sizes = [1, 128], strides = [1, 1]} : vector<4x128xf32> to vector<1x128xf32>
    %198 = vector.broadcast %197 : vector<1x128xf32> to vector<4x128xf32>
    %199 = arith.mulf %13, %198 : vector<4x128xf32>
    %200 = arith.addf %196, %199 : vector<4x128xf32>
    %201 = vector.extract_strided_slice %168 {offsets = [3, 0], sizes = [1, 128], strides = [1, 1]} : vector<4x128xf32> to vector<1x128xf32>
    %202 = vector.broadcast %201 : vector<1x128xf32> to vector<4x128xf32>
    %203 = arith.mulf %15, %202 : vector<4x128xf32>
    %204 = arith.addf %200, %203 : vector<4x128xf32>
    %cst_36 = arith.constant 0.000000e+00 : f32
    %205 = vector.broadcast %cst_36 : f32 to vector<4x128xf32>
    %206 = arith.maximumf %204, %205 : vector<4x128xf32>
    %207 = arith.addf %169, %206 : vector<4x128xf32>
    %c5_i32 = arith.constant 5 : i32
    %208 = arith.index_cast %c5_i32 : i32 to index
    %c0_37 = arith.constant 0 : index
    %c0_38 = arith.constant 0 : index
    %209 = vector.load %arg1[%208, %c0_37, %c0_38] : memref<8x4x128xf32, #tpu.memory_space<vmem>>, vector<1x4x128xf32>
    %210 = vector.shape_cast %209 : vector<1x4x128xf32> to vector<4x128xf32>
    %211 = vector.extract_strided_slice %210 {offsets = [0, 0], sizes = [1, 128], strides = [1, 1]} : vector<4x128xf32> to vector<1x128xf32>
    %212 = vector.broadcast %211 : vector<1x128xf32> to vector<4x128xf32>
    %213 = arith.mulf %1, %212 : vector<4x128xf32>
    %214 = arith.addf %16, %213 : vector<4x128xf32>
    %215 = vector.extract_strided_slice %210 {offsets = [1, 0], sizes = [1, 128], strides = [1, 1]} : vector<4x128xf32> to vector<1x128xf32>
    %216 = vector.broadcast %215 : vector<1x128xf32> to vector<4x128xf32>
    %217 = arith.mulf %3, %216 : vector<4x128xf32>
    %218 = arith.addf %214, %217 : vector<4x128xf32>
    %219 = vector.extract_strided_slice %210 {offsets = [2, 0], sizes = [1, 128], strides = [1, 1]} : vector<4x128xf32> to vector<1x128xf32>
    %220 = vector.broadcast %219 : vector<1x128xf32> to vector<4x128xf32>
    %221 = arith.mulf %5, %220 : vector<4x128xf32>
    %222 = arith.addf %218, %221 : vector<4x128xf32>
    %223 = vector.extract_strided_slice %210 {offsets = [3, 0], sizes = [1, 128], strides = [1, 1]} : vector<4x128xf32> to vector<1x128xf32>
    %224 = vector.broadcast %223 : vector<1x128xf32> to vector<4x128xf32>
    %225 = arith.mulf %7, %224 : vector<4x128xf32>
    %226 = arith.addf %222, %225 : vector<4x128xf32>
    %227 = vector.extract_strided_slice %206 {offsets = [0, 0], sizes = [1, 128], strides = [1, 1]} : vector<4x128xf32> to vector<1x128xf32>
    %228 = vector.broadcast %227 : vector<1x128xf32> to vector<4x128xf32>
    %229 = arith.mulf %9, %228 : vector<4x128xf32>
    %230 = arith.addf %226, %229 : vector<4x128xf32>
    %231 = vector.extract_strided_slice %206 {offsets = [1, 0], sizes = [1, 128], strides = [1, 1]} : vector<4x128xf32> to vector<1x128xf32>
    %232 = vector.broadcast %231 : vector<1x128xf32> to vector<4x128xf32>
    %233 = arith.mulf %11, %232 : vector<4x128xf32>
    %234 = arith.addf %230, %233 : vector<4x128xf32>
    %235 = vector.extract_strided_slice %206 {offsets = [2, 0], sizes = [1, 128], strides = [1, 1]} : vector<4x128xf32> to vector<1x128xf32>
    %236 = vector.broadcast %235 : vector<1x128xf32> to vector<4x128xf32>
    %237 = arith.mulf %13, %236 : vector<4x128xf32>
    %238 = arith.addf %234, %237 : vector<4x128xf32>
    %239 = vector.extract_strided_slice %206 {offsets = [3, 0], sizes = [1, 128], strides = [1, 1]} : vector<4x128xf32> to vector<1x128xf32>
    %240 = vector.broadcast %239 : vector<1x128xf32> to vector<4x128xf32>
    %241 = arith.mulf %15, %240 : vector<4x128xf32>
    %242 = arith.addf %238, %241 : vector<4x128xf32>
    %cst_39 = arith.constant 0.000000e+00 : f32
    %243 = vector.broadcast %cst_39 : f32 to vector<4x128xf32>
    %244 = arith.maximumf %242, %243 : vector<4x128xf32>
    %245 = arith.addf %207, %244 : vector<4x128xf32>
    %c6_i32 = arith.constant 6 : i32
    %246 = arith.index_cast %c6_i32 : i32 to index
    %c0_40 = arith.constant 0 : index
    %c0_41 = arith.constant 0 : index
    %247 = vector.load %arg1[%246, %c0_40, %c0_41] : memref<8x4x128xf32, #tpu.memory_space<vmem>>, vector<1x4x128xf32>
    %248 = vector.shape_cast %247 : vector<1x4x128xf32> to vector<4x128xf32>
    %249 = vector.extract_strided_slice %248 {offsets = [0, 0], sizes = [1, 128], strides = [1, 1]} : vector<4x128xf32> to vector<1x128xf32>
    %250 = vector.broadcast %249 : vector<1x128xf32> to vector<4x128xf32>
    %251 = arith.mulf %1, %250 : vector<4x128xf32>
    %252 = arith.addf %16, %251 : vector<4x128xf32>
    %253 = vector.extract_strided_slice %248 {offsets = [1, 0], sizes = [1, 128], strides = [1, 1]} : vector<4x128xf32> to vector<1x128xf32>
    %254 = vector.broadcast %253 : vector<1x128xf32> to vector<4x128xf32>
    %255 = arith.mulf %3, %254 : vector<4x128xf32>
    %256 = arith.addf %252, %255 : vector<4x128xf32>
    %257 = vector.extract_strided_slice %248 {offsets = [2, 0], sizes = [1, 128], strides = [1, 1]} : vector<4x128xf32> to vector<1x128xf32>
    %258 = vector.broadcast %257 : vector<1x128xf32> to vector<4x128xf32>
    %259 = arith.mulf %5, %258 : vector<4x128xf32>
    %260 = arith.addf %256, %259 : vector<4x128xf32>
    %261 = vector.extract_strided_slice %248 {offsets = [3, 0], sizes = [1, 128], strides = [1, 1]} : vector<4x128xf32> to vector<1x128xf32>
    %262 = vector.broadcast %261 : vector<1x128xf32> to vector<4x128xf32>
    %263 = arith.mulf %7, %262 : vector<4x128xf32>
    %264 = arith.addf %260, %263 : vector<4x128xf32>
    %265 = vector.extract_strided_slice %244 {offsets = [0, 0], sizes = [1, 128], strides = [1, 1]} : vector<4x128xf32> to vector<1x128xf32>
    %266 = vector.broadcast %265 : vector<1x128xf32> to vector<4x128xf32>
    %267 = arith.mulf %9, %266 : vector<4x128xf32>
    %268 = arith.addf %264, %267 : vector<4x128xf32>
    %269 = vector.extract_strided_slice %244 {offsets = [1, 0], sizes = [1, 128], strides = [1, 1]} : vector<4x128xf32> to vector<1x128xf32>
    %270 = vector.broadcast %269 : vector<1x128xf32> to vector<4x128xf32>
    %271 = arith.mulf %11, %270 : vector<4x128xf32>
    %272 = arith.addf %268, %271 : vector<4x128xf32>
    %273 = vector.extract_strided_slice %244 {offsets = [2, 0], sizes = [1, 128], strides = [1, 1]} : vector<4x128xf32> to vector<1x128xf32>
    %274 = vector.broadcast %273 : vector<1x128xf32> to vector<4x128xf32>
    %275 = arith.mulf %13, %274 : vector<4x128xf32>
    %276 = arith.addf %272, %275 : vector<4x128xf32>
    %277 = vector.extract_strided_slice %244 {offsets = [3, 0], sizes = [1, 128], strides = [1, 1]} : vector<4x128xf32> to vector<1x128xf32>
    %278 = vector.broadcast %277 : vector<1x128xf32> to vector<4x128xf32>
    %279 = arith.mulf %15, %278 : vector<4x128xf32>
    %280 = arith.addf %276, %279 : vector<4x128xf32>
    %cst_42 = arith.constant 0.000000e+00 : f32
    %281 = vector.broadcast %cst_42 : f32 to vector<4x128xf32>
    %282 = arith.maximumf %280, %281 : vector<4x128xf32>
    %283 = arith.addf %245, %282 : vector<4x128xf32>
    %c7_i32 = arith.constant 7 : i32
    %284 = arith.index_cast %c7_i32 : i32 to index
    %c0_43 = arith.constant 0 : index
    %c0_44 = arith.constant 0 : index
    %285 = vector.load %arg1[%284, %c0_43, %c0_44] : memref<8x4x128xf32, #tpu.memory_space<vmem>>, vector<1x4x128xf32>
    %286 = vector.shape_cast %285 : vector<1x4x128xf32> to vector<4x128xf32>
    %287 = vector.extract_strided_slice %286 {offsets = [0, 0], sizes = [1, 128], strides = [1, 1]} : vector<4x128xf32> to vector<1x128xf32>
    %288 = vector.broadcast %287 : vector<1x128xf32> to vector<4x128xf32>
    %289 = arith.mulf %1, %288 : vector<4x128xf32>
    %290 = arith.addf %16, %289 : vector<4x128xf32>
    %291 = vector.extract_strided_slice %286 {offsets = [1, 0], sizes = [1, 128], strides = [1, 1]} : vector<4x128xf32> to vector<1x128xf32>
    %292 = vector.broadcast %291 : vector<1x128xf32> to vector<4x128xf32>
    %293 = arith.mulf %3, %292 : vector<4x128xf32>
    %294 = arith.addf %290, %293 : vector<4x128xf32>
    %295 = vector.extract_strided_slice %286 {offsets = [2, 0], sizes = [1, 128], strides = [1, 1]} : vector<4x128xf32> to vector<1x128xf32>
    %296 = vector.broadcast %295 : vector<1x128xf32> to vector<4x128xf32>
    %297 = arith.mulf %5, %296 : vector<4x128xf32>
    %298 = arith.addf %294, %297 : vector<4x128xf32>
    %299 = vector.extract_strided_slice %286 {offsets = [3, 0], sizes = [1, 128], strides = [1, 1]} : vector<4x128xf32> to vector<1x128xf32>
    %300 = vector.broadcast %299 : vector<1x128xf32> to vector<4x128xf32>
    %301 = arith.mulf %7, %300 : vector<4x128xf32>
    %302 = arith.addf %298, %301 : vector<4x128xf32>
    %303 = vector.extract_strided_slice %282 {offsets = [0, 0], sizes = [1, 128], strides = [1, 1]} : vector<4x128xf32> to vector<1x128xf32>
    %304 = vector.broadcast %303 : vector<1x128xf32> to vector<4x128xf32>
    %305 = arith.mulf %9, %304 : vector<4x128xf32>
    %306 = arith.addf %302, %305 : vector<4x128xf32>
    %307 = vector.extract_strided_slice %282 {offsets = [1, 0], sizes = [1, 128], strides = [1, 1]} : vector<4x128xf32> to vector<1x128xf32>
    %308 = vector.broadcast %307 : vector<1x128xf32> to vector<4x128xf32>
    %309 = arith.mulf %11, %308 : vector<4x128xf32>
    %310 = arith.addf %306, %309 : vector<4x128xf32>
    %311 = vector.extract_strided_slice %282 {offsets = [2, 0], sizes = [1, 128], strides = [1, 1]} : vector<4x128xf32> to vector<1x128xf32>
    %312 = vector.broadcast %311 : vector<1x128xf32> to vector<4x128xf32>
    %313 = arith.mulf %13, %312 : vector<4x128xf32>
    %314 = arith.addf %310, %313 : vector<4x128xf32>
    %315 = vector.extract_strided_slice %282 {offsets = [3, 0], sizes = [1, 128], strides = [1, 1]} : vector<4x128xf32> to vector<1x128xf32>
    %316 = vector.broadcast %315 : vector<1x128xf32> to vector<4x128xf32>
    %317 = arith.mulf %15, %316 : vector<4x128xf32>
    %318 = arith.addf %314, %317 : vector<4x128xf32>
    %cst_45 = arith.constant 0.000000e+00 : f32
    %319 = vector.broadcast %cst_45 : f32 to vector<4x128xf32>
    %320 = arith.maximumf %318, %319 : vector<4x128xf32>
    %321 = arith.addf %283, %320 : vector<4x128xf32>
    %c8_i32 = arith.constant 8 : i32
    %c0_46 = arith.constant 0 : index
    %c0_47 = arith.constant 0 : index
    %322 = vector.load %arg5[%c0_46, %c0_47] : memref<4x128xf32, #tpu.memory_space<vmem>>, vector<4x128xf32>
    %323 = arith.mulf %321, %322 : vector<4x128xf32>
    %cst_48 = arith.constant dense<0.000000e+00> : vector<128xf32>
    %324 = vector.multi_reduction <add>, %323, %cst_48 [0] : vector<4x128xf32> to vector<128xf32>
    %325 = vector.shape_cast %324 : vector<128xf32> to vector<1x1x128xf32>
    %c0_49 = arith.constant 0 : index
    %c0_50 = arith.constant 0 : index
    %c0_51 = arith.constant 0 : index
    %326 = vector.load %arg6[%c0_49, %c0_50, %c0_51] : memref<1x1x128xf32, #tpu.memory_space<vmem>>, vector<1x1x128xf32>
    tpu.vector_store %arg6[%c0_49, %c0_50, %c0_51], %325 {strides = array<i32>} : memref<1x1x128xf32, #tpu.memory_space<vmem>>, vector<1x1x128xf32>,
    return
  }
  func.func @transform_0(%arg0: i32) -> (i32, i32, i32) {
    %c0_i32 = arith.constant 0 : i32
    %c0_i32_0 = arith.constant 0 : i32
    %c0_i32_1 = arith.constant 0 : i32
    return %c0_i32, %c0_i32_0, %arg0 : i32, i32, i32
  }
  func.func @transform_1(%arg0: i32) -> (i32, i32, i32) {
    %c0_i32 = arith.constant 0 : i32
    %c0_i32_0 = arith.constant 0 : i32
    %c0_i32_1 = arith.constant 0 : i32
    return %c0_i32, %c0_i32_0, %arg0 : i32, i32, i32
  }
  func.func @transform_2(%arg0: i32) -> (i32, i32, i32) {
    %c0_i32 = arith.constant 0 : i32
    %c0_i32_0 = arith.constant 0 : i32
    %c0_i32_1 = arith.constant 0 : i32
    return %c0_i32, %c0_i32_0, %arg0 : i32, i32, i32
  }
  func.func @transform_3(%arg0: i32) -> (i32, i32) {
    %c0_i32 = arith.constant 0 : i32
    %c0_i32_0 = arith.constant 0 : i32
    return %c0_i32, %arg0 : i32, i32
  }
  func.func @transform_4(%arg0: i32) -> (i32, i32) {
    %c0_i32 = arith.constant 0 : i32
    %c0_i32_0 = arith.constant 0 : i32
    return %c0_i32, %arg0 : i32, i32
  }
  func.func @transform_5(%arg0: i32) -> (i32, i32, i32) {
    %c0_i32 = arith.constant 0 : i32
    %c0_i32_0 = arith.constant 0 : i32
    %c0_i32_1 = arith.constant 0 : i32
    return %arg0, %c0_i32, %c0_i32_0 : i32, i32, i32
  }
}

</mosaic_0001>

<llo_original>
// kernel: tpu_custom_call.1
$region0: #{tpu_custom_call.1}
  #allocation0 [shape = 'u32[]', space=smem, size = 0x4, offset = 0x4, fixed_abs, tag = 'smem constant byte address 0x4 - core index']
  #allocation1 [shape = 'u32[72,128]{1,0:T(1,128)}', space=vmem, size = 0x9000, scoped, tag = 'internal scratch']
  %s0 = inlined_call_operand.hbm [shape: f32[8,4,128], index: 0, kind: input, shape index: {}]
  %s1 = inlined_call_operand.hbm [shape: f32[4,4,128], index: 1, kind: input, shape index: {}]
  %s2 = inlined_call_operand.hbm [shape: f32[4,4,128], index: 2, kind: input, shape index: {}]
  %s3 = inlined_call_operand.hbm [shape: f32[4,128], index: 3, kind: input, shape index: {}]
  %s4 = inlined_call_operand.hbm [shape: f32[4,128], index: 4, kind: input, shape index: {}]
  %s5 = inlined_call_operand.hbm [shape: f32[1,1,128], index: 5, kind: output, shape index: {}]
  %s6 = sld [smem:[#allocation0]]
  $region50: #{tpu_custom_call.1} parent=0
    _
  %s8 = ssub.s32 1, %s6
  %s9 = scalar_select 0, %s8, %s6
  $region1: #{tpu_custom_call.1} parent=0
    #allocation2 [shape = 'u8[16384]{0}', space=vmem, size = 0x4000, scoped, tag = 'input window, operand 0, single buffered']
    #allocation3 [shape = 's32[1]{0}', space=sflag, size = 0x4, scoped, tag = 'scoped memory for tpu_custom_call.1']
    #allocation4 [shape = 's32[1]{0}', space=sflag, size = 0x4, scoped, tag = 'scoped memory for tpu_custom_call.1']
    #allocation5 [shape = 'u8[8192]{0}', space=vmem, size = 0x2000, scoped, tag = 'input window, operand 1, single buffered']
    #allocation6 [shape = 's32[1]{0}', space=sflag, size = 0x4, scoped, tag = 'scoped memory for tpu_custom_call.1']
    #allocation7 [shape = 'u8[8192]{0}', space=vmem, size = 0x2000, scoped, tag = 'input window, operand 2, single buffered']
    #allocation8 [shape = 'u8[2048]{0}', space=vmem, size = 0x800, scoped, tag = 'input window, operand 3, single buffered']
    #allocation9 [shape = 's32[1]{0}', space=sflag, size = 0x4, scoped, tag = 'scoped memory for tpu_custom_call.1']
    #allocation10 [shape = 'u8[2048]{0}', space=vmem, size = 0x800, scoped, tag = 'input window, operand 4, single buffered']
    #allocation11 [shape = 'u8[512]{0}', space=vmem, size = 0x400, scoped, tag = 'output window, operand 0, single buffered']
    %10 = vsyncpa [#allocation3], 0
    %11 = vsyncpa [#allocation6], 0
    %12 = vsyncpa [#allocation9], 0
    %13 = vsyncpa [#allocation4], 0
    // Predicated region
    $region2: #{tpu_custom_call.1} parent=1 // pred_check
      _
    $region3: #{tpu_custom_call.1} parent=1 // pred_check_branch
      %15 = sbr.rel (0) target = $region5
    $region4: #{tpu_custom_call.1} parent=1 // pred_region
      %17 = vsyncadd [#allocation3], 0
      %s18 = sshll.u32 %s0, 4
      %s19 = int_to_ptr.hbm [resolvable:$true] %s18
      %s20 = sshll.u32 [#allocation2], 4
      %s21 = int_to_ptr.vmem [resolvable:$true] %s20
      %26 = dma.hbm_to_vmem [thread:$0]  %s19, 512, %s21, [#allocation3], 64, 64, 4
    $region5: #{tpu_custom_call.1} parent=1 // pred_fallthru
      _
    // Predicated region
    $region6: #{tpu_custom_call.1} parent=1 // pred_check
      _
    $region7: #{tpu_custom_call.1} parent=1 // pred_check_branch
      %28 = sbr.rel (0) target = $region9
    $region8: #{tpu_custom_call.1} parent=1 // pred_region
      %30 = vsyncadd [#allocation6], 0
      %s31 = sshll.u32 %s1, 4
      %s32 = int_to_ptr.hbm [resolvable:$true] %s31
      %s33 = sshll.u32 [#allocation5], 4
      %s34 = int_to_ptr.vmem [resolvable:$true] %s33
      %39 = dma.hbm_to_vmem [thread:$0]  %s32, 256, %s34, [#allocation6], 64, 64, 4
    $region9: #{tpu_custom_call.1} parent=1 // pred_fallthru
      _
    // Predicated region
    $region10: #{tpu_custom_call.1} parent=1 // pred_check
      _
    $region11: #{tpu_custom_call.1} parent=1 // pred_check_branch
      %41 = sbr.rel (0) target = $region13
    $region12: #{tpu_custom_call.1} parent=1 // pred_region
      %43 = vsyncadd [#allocation6], 0
      %s44 = sshll.u32 %s2, 4
      %s45 = int_to_ptr.hbm [resolvable:$true] %s44
      %s46 = sshll.u32 [#allocation7], 4
      %s47 = int_to_ptr.vmem [resolvable:$true] %s46
      %52 = dma.hbm_to_vmem [thread:$0]  %s45, 256, %s47, [#allocation6], 64, 64, 4
    $region13: #{tpu_custom_call.1} parent=1 // pred_fallthru
      _
    // Predicated region
    $region14: #{tpu_custom_call.1} parent=1 // pred_check
      _
    $region15: #{tpu_custom_call.1} parent=1 // pred_check_branch
      %54 = sbr.rel (0) target = $region17
    $region16: #{tpu_custom_call.1} parent=1 // pred_region
      %56 = vsyncadd [#allocation9], 0
      %s58 = sshll.u32 %s3, 4
      %s59 = int_to_ptr.hbm [resolvable:$true] %s58
      %s60 = sshll.u32 [#allocation8], 4
      %s61 = int_to_ptr.vmem [resolvable:$true] %s60
      %63 = dma.hbm_to_vmem [thread:$0]  %s59, 64, %s61, [#allocation9]
    $region17: #{tpu_custom_call.1} parent=1 // pred_fallthru
      _
    // Predicated region
    $region18: #{tpu_custom_call.1} parent=1 // pred_check
      _
    $region19: #{tpu_custom_call.1} parent=1 // pred_check_branch
      %65 = sbr.rel (0) target = $region21
    $region20: #{tpu_custom_call.1} parent=1 // pred_region
      %67 = vsyncadd [#allocation9], 0
      %s69 = sshll.u32 %s4, 4
      %s70 = int_to_ptr.hbm [resolvable:$true] %s69
      %s71 = sshll.u32 [#allocation10], 4
      %s72 = int_to_ptr.vmem [resolvable:$true] %s71
      %74 = dma.hbm_to_vmem [thread:$0]  %s70, 64, %s72, [#allocation9]
    $region21: #{tpu_custom_call.1} parent=1 // pred_fallthru
      _
    // Predicated region
    $region22: #{tpu_custom_call.1} parent=1 // pred_check
      _
    $region23: #{tpu_custom_call.1} parent=1 // pred_check_branch
      %76 = sbr.rel (0) target = $region25
    $region24: #{tpu_custom_call.1} parent=1 // pred_region
      %78 = dma.done [#allocation3], 512
    $region25: #{tpu_custom_call.1} parent=1 // pred_fallthru
      _
    // Predicated region
    $region26: #{tpu_custom_call.1} parent=1 // pred_check
      _
    $region27: #{tpu_custom_call.1} parent=1 // pred_check_branch
      %80 = sbr.rel (0) target = $region29
    $region28: #{tpu_custom_call.1} parent=1 // pred_region
      %82 = dma.done [#allocation6], 256
    $region29: #{tpu_custom_call.1} parent=1 // pred_fallthru
      _
    // Predicated region
    $region30: #{tpu_custom_call.1} parent=1 // pred_check
      _
    $region31: #{tpu_custom_call.1} parent=1 // pred_check_branch
      %84 = sbr.rel (0) target = $region33
    $region32: #{tpu_custom_call.1} parent=1 // pred_region
      %86 = dma.done [#allocation6], 256
    $region33: #{tpu_custom_call.1} parent=1 // pred_fallthru
      _
    // Predicated region
    $region34: #{tpu_custom_call.1} parent=1 // pred_check
      _
    $region35: #{tpu_custom_call.1} parent=1 // pred_check_branch
      %88 = sbr.rel (0) target = $region37
    $region36: #{tpu_custom_call.1} parent=1 // pred_region
      %90 = dma.done [#allocation9], 64
    $region37: #{tpu_custom_call.1} parent=1 // pred_fallthru
      _
    // Predicated region
    $region38: #{tpu_custom_call.1} parent=1 // pred_check
      _
    $region39: #{tpu_custom_call.1} parent=1 // pred_check_branch
      %92 = sbr.rel (0) target = $region41
    $region40: #{tpu_custom_call.1} parent=1 // pred_region
      %94 = dma.done [#allocation9], 64
    $region41: #{tpu_custom_call.1} parent=1 // pred_fallthru
      _
    %v95 = vld [vmem:[#allocation5] sm:$0xf]
    %s96 = scalar_lea.vmem [#allocation5], 4
    %v97 = vld [vmem:[%s96] sm:$0xf]
    %s98 = scalar_lea.vmem [#allocation5], 8
    %v99 = vld [vmem:[%s98] sm:$0xf]
    %s100 = scalar_lea.vmem [#allocation5], 12
    %v101 = vld [vmem:[%s100] sm:$0xf]
    %v102 = vld [vmem:[#allocation7] sm:$0xf]
    %s103 = scalar_lea.vmem [#allocation7], 4
    %v104 = vld [vmem:[%s103] sm:$0xf]
    %s105 = scalar_lea.vmem [#allocation7], 8
    %v106 = vld [vmem:[%s105] sm:$0xf]
    %s107 = scalar_lea.vmem [#allocation7], 12
    %v108 = vld [vmem:[%s107] sm:$0xf]
    %v109 = vld [vmem:[#allocation8] sm:$0xf]
    %v110 = vld [vmem:[#allocation2] sm:$0xf]
    %v111 = vperm.slane %v110, 0
    %v112 = vmul.f32 %v95, %v111
    %v113 = vadd.f32 %v109, %v112
    %v114 = vperm.slane %v110, 1
    %v115 = vmul.f32 %v97, %v114
    %v116 = vadd.f32 %v113, %v115
    %v117 = vperm.slane %v110, 2
    %v118 = vmul.f32 %v99, %v117
    %v119 = vadd.f32 %v116, %v118
    %v120 = vperm.slane %v110, 3
    %v121 = vmul.f32 %v101, %v120
    %v122 = vadd.f32 %v119, %v121
    %v123 = vmul.f32 %v102, 0.0
    %v124 = vadd.f32 %v122, %v123
    %v125 = vmul.f32 %v104, 0.0
    %v126 = vadd.f32 %v124, %v125
    %v127 = vmul.f32 %v106, 0.0
    %v128 = vadd.f32 %v126, %v127
    %v129 = vmul.f32 %v108, 0.0
    %v130 = vadd.f32 %v128, %v129
    %v131 = vmax.f32 %v130, 0.0
    %v132 = vadd.f32 %v131, 0.0
    %s133 = scalar_lea.vmem [#allocation2], 4
    %v134 = vld [vmem:[%s133] sm:$0xf]
    %v135 = vperm.slane %v134, 0
    %v136 = vmul.f32 %v95, %v135
    %v137 = vadd.f32 %v109, %v136
    %v138 = vperm.slane %v134, 1
    %v139 = vmul.f32 %v97, %v138
    %v140 = vadd.f32 %v137, %v139
    %v141 = vperm.slane %v134, 2
    %v142 = vmul.f32 %v99, %v141
    %v143 = vadd.f32 %v140, %v142
    %v144 = vperm.slane %v134, 3
    %v145 = vmul.f32 %v101, %v144
    %v146 = vadd.f32 %v143, %v145
    %v147 = vperm.slane %v131, 0
    %v148 = vmul.f32 %v102, %v147
    %v149 = vadd.f32 %v146, %v148
    %v150 = vperm.slane %v131, 1
    %v151 = vmul.f32 %v104, %v150
    %v152 = vadd.f32 %v149, %v151
    %v153 = vperm.slane %v131, 2
    %v154 = vmul.f32 %v106, %v153
    %v155 = vadd.f32 %v152, %v154
    %v156 = vperm.slane %v131, 3
    %v157 = vmul.f32 %v108, %v156
    %v158 = vadd.f32 %v155, %v157
    %v159 = vmax.f32 %v158, 0.0
    %v160 = vadd.f32 %v132, %v159
    %s161 = scalar_lea.vmem [#allocation2], 8
    %v162 = vld [vmem:[%s161] sm:$0xf]
    %v163 = vperm.slane %v162, 0
    %v164 = vmul.f32 %v95, %v163
    %v165 = vadd.f32 %v109, %v164
    %v166 = vperm.slane %v162, 1
    %v167 = vmul.f32 %v97, %v166
    %v168 = vadd.f32 %v165, %v167
    %v169 = vperm.slane %v162, 2
    %v170 = vmul.f32 %v99, %v169
    %v171 = vadd.f32 %v168, %v170
    %v172 = vperm.slane %v162, 3
    %v173 = vmul.f32 %v101, %v172
    %v174 = vadd.f32 %v171, %v173
    %v175 = vperm.slane %v159, 0
    %v176 = vmul.f32 %v102, %v175
    %v177 = vadd.f32 %v174, %v176
    %v178 = vperm.slane %v159, 1
    %v179 = vmul.f32 %v104, %v178
    %v180 = vadd.f32 %v177, %v179
    %v181 = vperm.slane %v159, 2
    %v182 = vmul.f32 %v106, %v181
    %v183 = vadd.f32 %v180, %v182
    %v184 = vperm.slane %v159, 3
    %v185 = vmul.f32 %v108, %v184
    %v186 = vadd.f32 %v183, %v185
    %v187 = vmax.f32 %v186, 0.0
    %v188 = vadd.f32 %v160, %v187
    %s189 = scalar_lea.vmem [#allocation2], 12
    %v190 = vld [vmem:[%s189] sm:$0xf]
    %v191 = vperm.slane %v190, 0
    %v192 = vmul.f32 %v95, %v191
    %v193 = vadd.f32 %v109, %v192
    %v194 = vperm.slane %v190, 1
    %v195 = vmul.f32 %v97, %v194
    %v196 = vadd.f32 %v193, %v195
    %v197 = vperm.slane %v190, 2
    %v198 = vmul.f32 %v99, %v197
    %v199 = vadd.f32 %v196, %v198
    %v200 = vperm.slane %v190, 3
    %v201 = vmul.f32 %v101, %v200
    %v202 = vadd.f32 %v199, %v201
    %v203 = vperm.slane %v187, 0
    %v204 = vmul.f32 %v102, %v203
    %v205 = vadd.f32 %v202, %v204
    %v206 = vperm.slane %v187, 1
    %v207 = vmul.f32 %v104, %v206
    %v208 = vadd.f32 %v205, %v207
    %v209 = vperm.slane %v187, 2
    %v210 = vmul.f32 %v106, %v209
    %v211 = vadd.f32 %v208, %v210
    %v212 = vperm.slane %v187, 3
    %v213 = vmul.f32 %v108, %v212
    %v214 = vadd.f32 %v211, %v213
    %v215 = vmax.f32 %v214, 0.0
    %v216 = vadd.f32 %v188, %v215
    %s217 = scalar_lea.vmem [#allocation2], 16
    %v218 = vld [vmem:[%s217] sm:$0xf]
    %v219 = vperm.slane %v218, 0
    %v220 = vmul.f32 %v95, %v219
    %v221 = vadd.f32 %v109, %v220
    %v222 = vperm.slane %v218, 1
    %v223 = vmul.f32 %v97, %v222
    %v224 = vadd.f32 %v221, %v223
    %v225 = vperm.slane %v218, 2
    %v226 = vmul.f32 %v99, %v225
    %v227 = vadd.f32 %v224, %v226
    %v228 = vperm.slane %v218, 3
    %v229 = vmul.f32 %v101, %v228
    %v230 = vadd.f32 %v227, %v229
    %v231 = vperm.slane %v215, 0
    %v232 = vmul.f32 %v102, %v231
    %v233 = vadd.f32 %v230, %v232
    %v234 = vperm.slane %v215, 1
    %v235 = vmul.f32 %v104, %v234
    %v236 = vadd.f32 %v233, %v235
    %v237 = vperm.slane %v215, 2
    %v238 = vmul.f32 %v106, %v237
    %v239 = vadd.f32 %v236, %v238
    %v240 = vperm.slane %v215, 3
    %v241 = vmul.f32 %v108, %v240
    %v242 = vadd.f32 %v239, %v241
    %v243 = vmax.f32 %v242, 0.0
    %v244 = vadd.f32 %v216, %v243
    %s245 = scalar_lea.vmem [#allocation2], 20
    %v246 = vld [vmem:[%s245] sm:$0xf]
    %v247 = vperm.slane %v246, 0
    %v248 = vmul.f32 %v95, %v247
    %v249 = vadd.f32 %v109, %v248
    %v250 = vperm.slane %v246, 1
    %v251 = vmul.f32 %v97, %v250
    %v252 = vadd.f32 %v249, %v251
    %v253 = vperm.slane %v246, 2
    %v254 = vmul.f32 %v99, %v253
    %v255 = vadd.f32 %v252, %v254
    %v256 = vperm.slane %v246, 3
    %v257 = vmul.f32 %v101, %v256
    %v258 = vadd.f32 %v255, %v257
    %v259 = vperm.slane %v243, 0
    %v260 = vmul.f32 %v102, %v259
    %v261 = vadd.f32 %v258, %v260
    %v262 = vperm.slane %v243, 1
    %v263 = vmul.f32 %v104, %v262
    %v264 = vadd.f32 %v261, %v263
    %v265 = vperm.slane %v243, 2
    %v266 = vmul.f32 %v106, %v265
    %v267 = vadd.f32 %v264, %v266
    %v268 = vperm.slane %v243, 3
    %v269 = vmul.f32 %v108, %v268
    %v270 = vadd.f32 %v267, %v269
    %v271 = vmax.f32 %v270, 0.0
    %v272 = vadd.f32 %v244, %v271
    %s273 = scalar_lea.vmem [#allocation2], 24
    %v274 = vld [vmem:[%s273] sm:$0xf]
    %v275 = vperm.slane %v274, 0
    %v276 = vmul.f32 %v95, %v275
    %v277 = vadd.f32 %v109, %v276
    %v278 = vperm.slane %v274, 1
    %v279 = vmul.f32 %v97, %v278
    %v280 = vadd.f32 %v277, %v279
    %v281 = vperm.slane %v274, 2
    %v282 = vmul.f32 %v99, %v281
    %v283 = vadd.f32 %v280, %v282
    %v284 = vperm.slane %v274, 3
    %v285 = vmul.f32 %v101, %v284
    %v286 = vadd.f32 %v283, %v285
    %v287 = vperm.slane %v271, 0
    %v288 = vmul.f32 %v102, %v287
    %v289 = vadd.f32 %v286, %v288
    %v290 = vperm.slane %v271, 1
    %v291 = vmul.f32 %v104, %v290
    %v292 = vadd.f32 %v289, %v291
    %v293 = vperm.slane %v271, 2
    %v294 = vmul.f32 %v106, %v293
    %v295 = vadd.f32 %v292, %v294
    %v296 = vperm.slane %v271, 3
    %v297 = vmul.f32 %v108, %v296
    %v298 = vadd.f32 %v295, %v297
    %v299 = vmax.f32 %v298, 0.0
    %v300 = vadd.f32 %v272, %v299
    %s301 = scalar_lea.vmem [#allocation2], 28
    %v302 = vld [vmem:[%s301] sm:$0xf]
    %v303 = vperm.slane %v302, 0
    %v304 = vmul.f32 %v95, %v303
    %v305 = vadd.f32 %v109, %v304
    %v306 = vperm.slane %v302, 1
    %v307 = vmul.f32 %v97, %v306
    %v308 = vadd.f32 %v305, %v307
    %v309 = vperm.slane %v302, 2
    %v310 = vmul.f32 %v99, %v309
    %v311 = vadd.f32 %v308, %v310
    %v312 = vperm.slane %v302, 3
    %v313 = vmul.f32 %v101, %v312
    %v314 = vadd.f32 %v311, %v313
    %v315 = vperm.slane %v299, 0
    %v316 = vmul.f32 %v102, %v315
    %v317 = vadd.f32 %v314, %v316
    %v318 = vperm.slane %v299, 1
    %v319 = vmul.f32 %v104, %v318
    %v320 = vadd.f32 %v317, %v319
    %v321 = vperm.slane %v299, 2
    %v322 = vmul.f32 %v106, %v321
    %v323 = vadd.f32 %v320, %v322
    %v324 = vperm.slane %v299, 3
    %v325 = vmul.f32 %v108, %v324
    %v326 = vadd.f32 %v323, %v325
    %v327 = vmax.f32 %v326, 0.0
    %v328 = vadd.f32 %v300, %v327
    %v329 = vld [vmem:[#allocation10] sm:$0xf]
    %v330 = vmul.f32 %v328, %v329
    %vm331 = vcmask 1043456
    %v332 = vsel %vm331, %v330, 0.0
    %v333 = vrot.slane %v332, 4
    %v334 = vadd.f32 %v332, %v333
    %v335 = vrot.slane %v334, 2
    %v336 = vadd.f32 %v334, %v335
    %v337 = vrot.slane %v336, 1
    %v338 = vadd.f32 %v336, %v337
    %339 = vst [vmem:[#allocation11] sm:$0x1] %v338
    // Predicated region
    $region42: #{tpu_custom_call.1} parent=1 // pred_check
      _
    $region43: #{tpu_custom_call.1} parent=1 // pred_check_branch
      %341 = sbr.rel (0) target = $region45
    $region44: #{tpu_custom_call.1} parent=1 // pred_region
      %343 = vsyncadd [#allocation4], 0
      %s345 = sshll.u32 [#allocation11], 4
      %s346 = int_to_ptr.vmem [resolvable:$true] %s345
      %s347 = sshll.u32 %s5, 4
      %s348 = int_to_ptr.hbm [resolvable:$true] %s347
      %350 = dma.vmem_to_hbm [thread:$0]  %s346, 16, %s348, [#allocation4]
    $region45: #{tpu_custom_call.1} parent=1 // pred_fallthru
      _
    // Predicated region
    $region46: #{tpu_custom_call.1} parent=1 // pred_check
      _
    $region47: #{tpu_custom_call.1} parent=1 // pred_check_branch
      %352 = sbr.rel (0) target = $region49
    $region48: #{tpu_custom_call.1} parent=1 // pred_region
      %354 = dma.done [#allocation4], 16
    $region49: #{tpu_custom_call.1} parent=1 // pred_fallthru
      _
    %355 = vsyncpa [#allocation3], 1
    %356 = vsyncpa [#allocation6], 1
    %357 = vsyncpa [#allocation9], 1
    %358 = vsyncpa [#allocation4], 1

</llo_original>
